<compile_context>
chip_gen: v7x
topology: tpu7x:2x2x1
jax: 0.10.0
libtpu: 0.0.40
codegen_flags: <defaults>
</compile_context>

<pallas_src>
import functools

import jax
import jax.numpy as jnp
from jax.experimental import pallas as pl
from jax.experimental.pallas import tpu as pltpu


def _club_kernel(x_ref, y_ref, ys_ref, w1_ref, b1_ref, w2_ref, b2_ref,
                 out_ref, *, y_dim, inv_two_n):
    step = pl.program_id(0)

    @pl.when(step == 0)
    def _init():
        out_ref[...] = jnp.zeros_like(out_ref)

    # Fused first layer for both heads: (TN, x_dim) @ (x_dim, 2h), bf16 -> f32.
    h = jnp.dot(x_ref[...], w1_ref[...],
                preferred_element_type=jnp.float32) + b1_ref[...]
    h = jnp.maximum(h, 0.0)

    # Fused block-diagonal second layer: (TN, 2h) @ (2h, 2*y_dim).
    z = jnp.dot(h.astype(jnp.bfloat16), w2_ref[...],
                preferred_element_type=jnp.float32) + b2_ref[...]

    mu = z[:, :y_dim]                         # (TN, y_dim) f32
    logvar = jnp.tanh(z[:, y_dim:])           # (TN, y_dim) f32
    inv_var = jnp.exp(-logvar)                # 1 / exp(logvar)

    y = y_ref[...]
    ys = ys_ref[...]
    # positive - negative == inv_var * ((mu-ys)^2 - (mu-y)^2)
    #                      == inv_var * (y - ys) * (2*mu - y - ys)
    diff = inv_var * (y - ys) * (2.0 * mu - y - ys)

    partial = jnp.sum(diff, axis=-1, keepdims=True)    # (TN, 1)
    partial = jnp.sum(partial, axis=0, keepdims=True)  # (1, 1)
    out_ref[...] += partial

    @pl.when(step == pl.num_programs(0) - 1)
    def _finalize():
        out_ref[...] = out_ref[...] * inv_two_n        # mean(...)/2 == sum/(2N)


def _choose_tile(n):
    for t in (128, 64, 32, 16, 8):
        if n % t == 0:
            return t
    return n  # fall back to a single full-batch block (always layout-legal)


def club_sample_forward(x, y, perm, params):
    """CLUBSample.forward: returns upper_bound / 2 (scalar float32)."""
    n, x_dim = x.shape
    y_dim = y.shape[1]

    (w1m, b1m, w2m, b2m, w1v, b1v, w2v, b2v) = params
    h = w1m.shape[1]

    # Fuse the two heads: single (x_dim, 2h) first layer and block-diagonal
    # (2h, 2*y_dim) second layer -> 2 MXU passes per tile instead of 4.
    w1 = jnp.concatenate([w1m, w1v], axis=1).astype(jnp.bfloat16)
    b1 = jnp.concatenate([b1m, b1v], axis=1).astype(jnp.float32)
    zeros = jnp.zeros((h, y_dim), jnp.float32)
    w2 = jnp.concatenate(
        [jnp.concatenate([w2m, zeros], axis=1),
         jnp.concatenate([zeros, w2v], axis=1)], axis=0).astype(jnp.bfloat16)
    b2 = jnp.concatenate([b2m, b2v], axis=1).astype(jnp.float32)

    xb = x.astype(jnp.bfloat16)     # bf16 MXU operands, f32 accumulation
    y = y.astype(jnp.float32)
    # TODO(synk): move this permutation gather in-kernel via scalar prefetch
    # (PrefetchScalarGridSpec row-gather) to drop the extra HBM copy of y.
    y_shuf = y[perm]

    tn = _choose_tile(n)
    grid = (n // tn,)

    kernel = functools.partial(_club_kernel, y_dim=y_dim,
                               inv_two_n=1.0 / (2.0 * n))

    batch_spec = lambda d: pl.BlockSpec((tn, d), lambda i: (i, 0))
    const_spec = lambda a: pl.BlockSpec(a.shape, lambda i: (0, 0))

    out = pl.pallas_call(
        kernel,
        out_shape=jax.ShapeDtypeStruct((1, 1), jnp.float32),
        grid=grid,
        in_specs=[batch_spec(x_dim), batch_spec(y_dim), batch_spec(y_dim),
                  const_spec(w1), const_spec(b1),
                  const_spec(w2), const_spec(b2)],
        out_specs=pl.BlockSpec((1, 1), lambda i: (0, 0)),
        compiler_params=pltpu.CompilerParams(
            dimension_semantics=("arbitrary",),     # output block reused
            vmem_limit_bytes=32 * 1024 * 1024),
    )(xb, y, y_shuf, w1, b1, w2, b2)
    return out[0, 0]


def init_params(key, x_dim, y_dim, hidden_size):
    """Deterministic init of the two MLPs (p_mu, p_logvar). Weights are (in, out)."""
    h = hidden_size // 2
    ks = jax.random.split(key, 8)

    def lin(kw, kb, fan_in, fan_out):
        bound = 1.0 / jnp.sqrt(fan_in)
        w = jax.random.uniform(kw, (fan_in, fan_out), jnp.float32, -bound, bound)
        b = jax.random.uniform(kb, (1, fan_out), jnp.float32, -bound, bound)
        return w, b

    w1m, b1m = lin(ks[0], ks[1], x_dim, h)
    w2m, b2m = lin(ks[2], ks[3], h, y_dim)
    w1v, b1v = lin(ks[4], ks[5], x_dim, h)
    w2v, b2v = lin(ks[6], ks[7], h, y_dim)
    return (w1m, b1m, w2m, b2m, w1v, b1v, w2v, b2v)


def reference_forward(x, y, perm, params):
    """Pure-JAX reference mirroring the PyTorch forward (same bf16 matmul
    operands / f32 accumulation as the kernel, original un-simplified math)."""
    (w1m, b1m, w2m, b2m, w1v, b1v, w2v, b2v) = params
    xb = x.astype(jnp.bfloat16)

    def mlp(w1, b1, w2, b2):
        hh = jnp.maximum(
            jnp.dot(xb, w1.astype(jnp.bfloat16),
                    preferred_element_type=jnp.float32) + b1, 0.0)
        return jnp.dot(hh.astype(jnp.bfloat16), w2.astype(jnp.bfloat16),
                       preferred_element_type=jnp.float32) + b2

    mu = mlp(w1m, b1m, w2m, b2m)
    logvar = jnp.tanh(mlp(w1v, b1v, w2v, b2v))
    pos = -(mu - y) ** 2 / jnp.exp(logvar)
    neg = -(mu - y[perm]) ** 2 / jnp.exp(logvar)
    return (pos.sum(-1) - neg.sum(-1)).mean() / 2.0


if __name__ == "__main__":
    N, X_DIM, Y_DIM, HIDDEN = 256, 32, 16, 32

    key = jax.random.PRNGKey(0)
    kx, ky, kperm, kparam = jax.random.split(key, 4)

    x = jax.random.normal(kx, (N, X_DIM), jnp.float32)
    y = jax.random.normal(ky, (N, Y_DIM), jnp.float32)
    perm = jax.random.permutation(kperm, N)   # deterministic stand-in for torch.randperm

    params = init_params(kparam, X_DIM, Y_DIM, HIDDEN)

    out = jax.block_until_ready(club_sample_forward(x, y, perm, params))
    ref = jax.block_until_ready(reference_forward(x, y, perm, params))

    assert jnp.allclose(out, ref, atol=2e-4, rtol=2e-4), (out, ref)
    print("KERNEL_OK")
</pallas_src>

<mosaic_0001>
module attributes {stable_mosaic.version = 11 : i64} {
  func.func @_club_kernel(%arg0: i32, %arg1: memref<128x32xbf16, #tpu.memory_space<vmem>>, %arg2: memref<128x16xf32, #tpu.memory_space<vmem>>, %arg3: memref<128x16xf32, #tpu.memory_space<vmem>>, %arg4: memref<32x32xbf16, #tpu.memory_space<vmem>>, %arg5: memref<1x32xf32, #tpu.memory_space<vmem>>, %arg6: memref<32x32xbf16, #tpu.memory_space<vmem>>, %arg7: memref<1x32xf32, #tpu.memory_space<vmem>>, %arg8: memref<1x1xf32, #tpu.memory_space<vmem>>) attributes {dimension_semantics = [#tpu.dimension_semantics<arbitrary>], iteration_bounds = array<i64: 2>, scalar_prefetch = 0 : i64, scratch_operands = 0 : i64, tpu.core_type = #tpu.core_type<tc>, window_params = [{transform_indices = @transform_0, window_bounds = array<i64: 128, 32>}, {transform_indices = @transform_1, window_bounds = array<i64: 128, 16>}, {transform_indices = @transform_2, window_bounds = array<i64: 128, 16>}, {pipeline_mode = #tpu.pipeline_mode<synchronous>, transform_indices = @transform_3, window_bounds = array<i64: 32, 32>}, {pipeline_mode = #tpu.pipeline_mode<synchronous>, transform_indices = @transform_4, window_bounds = array<i64: 1, 32>}, {pipeline_mode = #tpu.pipeline_mode<synchronous>, transform_indices = @transform_5, window_bounds = array<i64: 32, 32>}, {pipeline_mode = #tpu.pipeline_mode<synchronous>, transform_indices = @transform_6, window_bounds = array<i64: 1, 32>}, {pipeline_mode = #tpu.pipeline_mode<synchronous>, transform_indices = @transform_7, window_bounds = array<i64: 1, 1>}]} {
    %c0_i32 = arith.constant 0 : i32
    %0 = arith.cmpi eq, %arg0, %c0_i32 : i32
    %1 = arith.extui %0 : i1 to i32
    %c0_i32_0 = arith.constant 0 : i32
    %2 = arith.cmpi ne, %1, %c0_i32_0 : i32
    scf.if %2 {
      %cst_25 = arith.constant 0.000000e+00 : f32
      %42 = vector.broadcast %cst_25 : f32 to vector<1x1xf32>
      %c0_26 = arith.constant 0 : index
      %c0_27 = arith.constant 0 : index
      %43 = vector.load %arg8[%c0_26, %c0_27] : memref<1x1xf32, #tpu.memory_space<vmem>>, vector<1x1xf32>
      tpu.vector_store %arg8[%c0_26, %c0_27], %42 {strides = array<i32>} : memref<1x1xf32, #tpu.memory_space<vmem>>, vector<1x1xf32>,
    } else {
    }
    %c0 = arith.constant 0 : index
    %c0_1 = arith.constant 0 : index
    %3 = vector.load %arg1[%c0, %c0_1] : memref<128x32xbf16, #tpu.memory_space<vmem>>, vector<128x32xbf16>
    %c0_2 = arith.constant 0 : index
    %c0_3 = arith.constant 0 : index
    %4 = vector.load %arg4[%c0_2, %c0_3] : memref<32x32xbf16, #tpu.memory_space<vmem>>, vector<32x32xbf16>
    %cst = arith.constant dense<0.000000e+00> : vector<128x32xf32>
    %5 = tpu.matmul %3, %4, %cst {dimension_numbers = #tpu.dot_dimension_numbers<[1], [0], [0], [1], [0, 0, 1, 1], [], []>} : vector<128x32xbf16>, vector<32x32xbf16>, vector<128x32xf32> -> vector<128x32xf32>
    %c0_4 = arith.constant 0 : index
    %c0_5 = arith.constant 0 : index
    %6 = vector.load %arg5[%c0_4, %c0_5] : memref<1x32xf32, #tpu.memory_space<vmem>>, vector<1x32xf32>
    %7 = vector.broadcast %6 : vector<1x32xf32> to vector<128x32xf32>
    %8 = arith.addf %5, %7 : vector<128x32xf32>
    %cst_6 = arith.constant 0.000000e+00 : f32
    %9 = vector.broadcast %cst_6 : f32 to vector<128x32xf32>
    %10 = arith.maximumf %8, %9 : vector<128x32xf32>
    %11 = arith.truncf %10 : vector<128x32xf32> to vector<128x32xbf16>
    %c0_7 = arith.constant 0 : index
    %c0_8 = arith.constant 0 : index
    %12 = vector.load %arg6[%c0_7, %c0_8] : memref<32x32xbf16, #tpu.memory_space<vmem>>, vector<32x32xbf16>
    %cst_9 = arith.constant dense<0.000000e+00> : vector<128x32xf32>
    %13 = tpu.matmul %11, %12, %cst_9 {dimension_numbers = #tpu.dot_dimension_numbers<[1], [0], [0], [1], [0, 0, 1, 1], [], []>} : vector<128x32xbf16>, vector<32x32xbf16>, vector<128x32xf32> -> vector<128x32xf32>
    %c0_10 = arith.constant 0 : index
    %c0_11 = arith.constant 0 : index
    %14 = vector.load %arg7[%c0_10, %c0_11] : memref<1x32xf32, #tpu.memory_space<vmem>>, vector<1x32xf32>
    %15 = vector.broadcast %14 : vector<1x32xf32> to vector<128x32xf32>
    %16 = arith.addf %13, %15 : vector<128x32xf32>
    %17 = vector.extract_strided_slice %16 {offsets = [0, 0], sizes = [128, 16], strides = [1, 1]} : vector<128x32xf32> to vector<128x16xf32>
    %18 = vector.extract_strided_slice %16 {offsets = [0, 16], sizes = [128, 16], strides = [1, 1]} : vector<128x32xf32> to vector<128x16xf32>
    %19 = math.tanh %18 : vector<128x16xf32>
    %cst_12 = arith.constant 0.000000e+00 : f32
    %20 = vector.broadcast %cst_12 : f32 to vector<128x16xf32>
    %21 = arith.subf %20, %19 : vector<128x16xf32>
    %22 = math.exp %21 : vector<128x16xf32>
    %c0_13 = arith.constant 0 : index
    %c0_14 = arith.constant 0 : index
    %23 = vector.load %arg2[%c0_13, %c0_14] : memref<128x16xf32, #tpu.memory_space<vmem>>, vector<128x16xf32>
    %c0_15 = arith.constant 0 : index
    %c0_16 = arith.constant 0 : index
    %24 = vector.load %arg3[%c0_15, %c0_16] : memref<128x16xf32, #tpu.memory_space<vmem>>, vector<128x16xf32>
    %25 = arith.subf %23, %24 : vector<128x16xf32>
    %26 = arith.mulf %22, %25 : vector<128x16xf32>
    %cst_17 = arith.constant 2.000000e+00 : f32
    %27 = vector.broadcast %cst_17 : f32 to vector<128x16xf32>
    %28 = arith.mulf %27, %17 : vector<128x16xf32>
    %29 = arith.subf %28, %23 : vector<128x16xf32>
    %30 = arith.subf %29, %24 : vector<128x16xf32>
    %31 = arith.mulf %26, %30 : vector<128x16xf32>
    %cst_18 = arith.constant dense<0.000000e+00> : vector<128xf32>
    %32 = vector.multi_reduction <add>, %31, %cst_18 [1] : vector<128x16xf32> to vector<128xf32>
    %33 = vector.shape_cast %32 : vector<128xf32> to vector<128x1xf32>
    %cst_19 = arith.constant dense<0.000000e+00> : vector<1xf32>
    %34 = vector.multi_reduction <add>, %33, %cst_19 [0] : vector<128x1xf32> to vector<1xf32>
    %35 = vector.shape_cast %34 : vector<1xf32> to vector<1x1xf32>
    %c0_20 = arith.constant 0 : index
    %c0_21 = arith.constant 0 : index
    %36 = vector.load %arg8[%c0_20, %c0_21] : memref<1x1xf32, #tpu.memory_space<vmem>>, vector<1x1xf32>
    %37 = arith.addf %36, %35 : vector<1x1xf32>
    %c0_22 = arith.constant 0 : index
    %c0_23 = arith.constant 0 : index
    %38 = vector.load %arg8[%c0_22, %c0_23] : memref<1x1xf32, #tpu.memory_space<vmem>>, vector<1x1xf32>
    tpu.vector_store %arg8[%c0_22, %c0_23], %37 {strides = array<i32>} : memref<1x1xf32, #tpu.memory_space<vmem>>, vector<1x1xf32>,
    %c1_i32 = arith.constant 1 : i32
    %39 = arith.cmpi eq, %arg0, %c1_i32 : i32
    %40 = arith.extui %39 : i1 to i32
    %c0_i32_24 = arith.constant 0 : i32
    %41 = arith.cmpi ne, %40, %c0_i32_24 : i32
    scf.if %41 {
      %c0_25 = arith.constant 0 : index
      %c0_26 = arith.constant 0 : index
      %42 = vector.load %arg8[%c0_25, %c0_26] : memref<1x1xf32, #tpu.memory_space<vmem>>, vector<1x1xf32>
      %cst_27 = arith.constant 0.001953125 : f32
      %43 = vector.broadcast %cst_27 : f32 to vector<1x1xf32>
      %44 = arith.mulf %42, %43 : vector<1x1xf32>
      %c0_28 = arith.constant 0 : index
      %c0_29 = arith.constant 0 : index
      %45 = vector.load %arg8[%c0_28, %c0_29] : memref<1x1xf32, #tpu.memory_space<vmem>>, vector<1x1xf32>
      tpu.vector_store %arg8[%c0_28, %c0_29], %44 {strides = array<i32>} : memref<1x1xf32, #tpu.memory_space<vmem>>, vector<1x1xf32>,
    } else {
    }
    return
  }
  func.func @transform_0(%arg0: i32) -> (i32, i32) {
    %c0_i32 = arith.constant 0 : i32
    %c0_i32_0 = arith.constant 0 : i32
    return %arg0, %c0_i32 : i32, i32
  }
  func.func @transform_1(%arg0: i32) -> (i32, i32) {
    %c0_i32 = arith.constant 0 : i32
    %c0_i32_0 = arith.constant 0 : i32
    return %arg0, %c0_i32 : i32, i32
  }
  func.func @transform_2(%arg0: i32) -> (i32, i32) {
    %c0_i32 = arith.constant 0 : i32
    %c0_i32_0 = arith.constant 0 : i32
    return %arg0, %c0_i32 : i32, i32
  }
  func.func @transform_3(%arg0: i32) -> (i32, i32) {
    %c0_i32 = arith.constant 0 : i32
    %c0_i32_0 = arith.constant 0 : i32
    %c0_i32_1 = arith.constant 0 : i32
    return %c0_i32, %c0_i32_0 : i32, i32
  }
  func.func @transform_4(%arg0: i32) -> (i32, i32) {
    %c0_i32 = arith.constant 0 : i32
    %c0_i32_0 = arith.constant 0 : i32
    %c0_i32_1 = arith.constant 0 : i32
    return %c0_i32, %c0_i32_0 : i32, i32
  }
  func.func @transform_5(%arg0: i32) -> (i32, i32) {
    %c0_i32 = arith.constant 0 : i32
    %c0_i32_0 = arith.constant 0 : i32
    %c0_i32_1 = arith.constant 0 : i32
    return %c0_i32, %c0_i32_0 : i32, i32
  }
  func.func @transform_6(%arg0: i32) -> (i32, i32) {
    %c0_i32 = arith.constant 0 : i32
    %c0_i32_0 = arith.constant 0 : i32
    %c0_i32_1 = arith.constant 0 : i32
    return %c0_i32, %c0_i32_0 : i32, i32
  }
  func.func @transform_7(%arg0: i32) -> (i32, i32) {
    %c0_i32 = arith.constant 0 : i32
    %c0_i32_0 = arith.constant 0 : i32
    %c0_i32_1 = arith.constant 0 : i32
    return %c0_i32, %c0_i32_0 : i32, i32
  }
}

</mosaic_0001>

<llo_original>
// kernel: tpu_custom_call.1
$region0: #{tpu_custom_call.1}
  #allocation0 [shape = 'u32[]', space=smem, size = 0x4, offset = 0x4, fixed_abs, tag = 'smem constant byte address 0x4 - core index']
  #allocation1 [shape = 'u32[144,128]{1,0:T(1,128)}', space=vmem, size = 0x12000, scoped, tag = 'internal scratch']
  %s0 = inlined_call_operand.vmem [shape: bf16[256,32], index: 0, kind: input, shape index: {}]
  %s1 = inlined_call_operand.vmem [shape: f32[256,16], index: 1, kind: input, shape index: {}]
  %s2 = inlined_call_operand.vmem [shape: f32[256,16], index: 2, kind: input, shape index: {}]
  %s3 = inlined_call_operand.vmem [shape: bf16[32,32], index: 3, kind: input, shape index: {}]
  %s4 = inlined_call_operand.vmem [shape: f32[1,32], index: 4, kind: input, shape index: {}]
  %s5 = inlined_call_operand.vmem [shape: bf16[32,32], index: 5, kind: input, shape index: {}]
  %s6 = inlined_call_operand.vmem [shape: f32[1,32], index: 6, kind: input, shape index: {}]
  %s7 = inlined_call_operand.hbm [shape: f32[1,1], index: 7, kind: output, shape index: {}]
  %s8 = sld [smem:[#allocation0]]
  $region69: #{tpu_custom_call.1} parent=0
    _
  %s10 = ssub.s32 1, %s8
  %s11 = scalar_select 0, %s10, %s8
  $region1: #{tpu_custom_call.1} parent=0
    #allocation2 [shape = 'u8[512]{0}', space=vmem, size = 0x400, scoped, tag = 'output window, operand 0, single buffered']
    #allocation3 [shape = 's32[2]{0}', space=sflag, size = 0x8, scoped, tag = 'scoped memory for tpu_custom_call.1']
    %12 = vsyncpa [#allocation3], 0
    loop: start=0, step=1, limit=4
    $region2: #{tpu_custom_call.1} parent=1 // loop_pre_header
      _
    $region3: #{tpu_custom_call.1} parent=1 // loop_header
      %s14 = sphi 0, %s18
      %p15 = scmp.ge.s32.totalorder %s14, 4
      %s24 = sphi 0, %s26
      %s27 = sphi 0, %s24
      %s28 = sphi 0, %s27
      %s44 = sphi 0, %s28
      %s50 = sphi 0, %s52
      %s53 = sphi 0, %s50
      %s54 = sphi 0, %s53
      %s70 = sphi 0, %s54
      %s76 = sphi 0, %s78
      %s79 = sphi 0, %s76
      %s80 = sphi 0, %s79
      %s96 = sphi 0, %s80
      %s100 = sphi 0, %s100
      %s102 = sphi 0, %s100
      %s103 = sphi 0, %s102
      %s117 = sphi 0, %s103
      %s121 = sphi 0, %s121
      %s123 = sphi 0, %s121
      %s124 = sphi 0, %s123
      %s138 = sphi 0, %s124
      %s142 = sphi 0, %s142
      %s144 = sphi 0, %s142
      %s145 = sphi 0, %s144
      %s159 = sphi 0, %s145
      %s163 = sphi 0, %s163
      %s165 = sphi 0, %s163
      %s166 = sphi 0, %s165
      %s180 = sphi 0, %s166
      %s184 = sphi 0, %s184
      %s186 = sphi 0, %s184
      %s187 = sphi 0, %s186
      %s201 = sphi 0, %s187
    $region4: #{tpu_custom_call.1} parent=1 // loop_header_branch
      %17 = sbr.rel (%p15) target = $region8
    $region5: #{tpu_custom_call.1} parent=1 // loop_body
      %s19 = ssub.s32 %s14, 1
      %s20 = ssub.s32 %s14, 2
      %s21 = sadd.s32 %s14, 1
      %s22 = ssub.s32 %s14, %s21
      %p23 = scmp.eq.s32.totalorder %s22, 0
      %s25 = sadd.s32 %s24, 1
      %s26 = scalar_select %p23, %s24, %s25
      %p29 = pneg %p23
      %p30 = scmp.eq.s32.totalorder %s14, 1
      %p31 = por %p29, %p30
      %p32 = scmp.ne.s32.totalorder %s24, %s27
      %p33 = scmp.eq.s32.totalorder %s14, 0
      %p34 = por %p32, %p33
      %p35 = scmp.ne.s32.totalorder %s24, %s27
      %p36 = scmp.eq.s32.totalorder %s19, 1
      %p37 = por %p35, %p36
      %p38 = scmp.ne.s32.totalorder %s27, %s28
      %p39 = scmp.eq.s32.totalorder %s19, 0
      %p40 = por %p38, %p39
      %p41 = scmp.ne.s32.totalorder %s27, %s28
      %p42 = scmp.eq.s32.totalorder %s20, 1
      %p43 = por %p41, %p42
      %p45 = scmp.ne.s32.totalorder %s28, %s44
      %p46 = scmp.eq.s32.totalorder %s20, 0
      %p47 = por %p45, %p46
      %s48 = ssub.s32 %s14, %s21
      %p49 = scmp.eq.s32.totalorder %s48, 0
      %s51 = sadd.s32 %s50, 1
      %s52 = scalar_select %p49, %s50, %s51
      %p55 = pneg %p49
      %p56 = scmp.eq.s32.totalorder %s14, 1
      %p57 = por %p55, %p56
      %p58 = scmp.ne.s32.totalorder %s50, %s53
      %p59 = scmp.eq.s32.totalorder %s14, 0
      %p60 = por %p58, %p59
      %p61 = scmp.ne.s32.totalorder %s50, %s53
      %p62 = scmp.eq.s32.totalorder %s19, 1
      %p63 = por %p61, %p62
      %p64 = scmp.ne.s32.totalorder %s53, %s54
      %p65 = scmp.eq.s32.totalorder %s19, 0
      %p66 = por %p64, %p65
      %p67 = scmp.ne.s32.totalorder %s53, %s54
      %p68 = scmp.eq.s32.totalorder %s20, 1
      %p69 = por %p67, %p68
      %p71 = scmp.ne.s32.totalorder %s54, %s70
      %p72 = scmp.eq.s32.totalorder %s20, 0
      %p73 = por %p71, %p72
      %s74 = ssub.s32 %s14, %s21
      %p75 = scmp.eq.s32.totalorder %s74, 0
      %s77 = sadd.s32 %s76, 1
      %s78 = scalar_select %p75, %s76, %s77
      %p81 = pneg %p75
      %p82 = scmp.eq.s32.totalorder %s14, 1
      %p83 = por %p81, %p82
      %p84 = scmp.ne.s32.totalorder %s76, %s79
      %p85 = scmp.eq.s32.totalorder %s14, 0
      %p86 = por %p84, %p85
      %p87 = scmp.ne.s32.totalorder %s76, %s79
      %p88 = scmp.eq.s32.totalorder %s19, 1
      %p89 = por %p87, %p88
      %p90 = scmp.ne.s32.totalorder %s79, %s80
      %p91 = scmp.eq.s32.totalorder %s19, 0
      %p92 = por %p90, %p91
      %p93 = scmp.ne.s32.totalorder %s79, %s80
      %p94 = scmp.eq.s32.totalorder %s20, 1
      %p95 = por %p93, %p94
      %p97 = scmp.ne.s32.totalorder %s80, %s96
      %p98 = scmp.eq.s32.totalorder %s20, 0
      %p99 = por %p97, %p98
      %s101 = sadd.s32 %s100, 1
      %p104 = scmp.eq.s32.totalorder %s14, 1
      %p105 = scmp.ne.s32.totalorder %s100, %s102
      %p106 = scmp.eq.s32.totalorder %s14, 0
      %p107 = por %p105, %p106
      %p108 = scmp.ne.s32.totalorder %s100, %s102
      %p109 = scmp.eq.s32.totalorder %s19, 1
      %p110 = por %p108, %p109
      %p111 = scmp.ne.s32.totalorder %s102, %s103
      %p112 = scmp.eq.s32.totalorder %s19, 0
      %p113 = por %p111, %p112
      %p114 = scmp.ne.s32.totalorder %s102, %s103
      %p115 = scmp.eq.s32.totalorder %s20, 1
      %p116 = por %p114, %p115
      %p118 = scmp.ne.s32.totalorder %s103, %s117
      %p119 = scmp.eq.s32.totalorder %s20, 0
      %p120 = por %p118, %p119
      %s122 = sadd.s32 %s121, 1
      %p125 = scmp.eq.s32.totalorder %s14, 1
      %p126 = scmp.ne.s32.totalorder %s121, %s123
      %p127 = scmp.eq.s32.totalorder %s14, 0
      %p128 = por %p126, %p127
      %p129 = scmp.ne.s32.totalorder %s121, %s123
      %p130 = scmp.eq.s32.totalorder %s19, 1
      %p131 = por %p129, %p130
      %p132 = scmp.ne.s32.totalorder %s123, %s124
      %p133 = scmp.eq.s32.totalorder %s19, 0
      %p134 = por %p132, %p133
      %p135 = scmp.ne.s32.totalorder %s123, %s124
      %p136 = scmp.eq.s32.totalorder %s20, 1
      %p137 = por %p135, %p136
      %p139 = scmp.ne.s32.totalorder %s124, %s138
      %p140 = scmp.eq.s32.totalorder %s20, 0
      %p141 = por %p139, %p140
      %s143 = sadd.s32 %s142, 1
      %p146 = scmp.eq.s32.totalorder %s14, 1
      %p147 = scmp.ne.s32.totalorder %s142, %s144
      %p148 = scmp.eq.s32.totalorder %s14, 0
      %p149 = por %p147, %p148
      %p150 = scmp.ne.s32.totalorder %s142, %s144
      %p151 = scmp.eq.s32.totalorder %s19, 1
      %p152 = por %p150, %p151
      %p153 = scmp.ne.s32.totalorder %s144, %s145
      %p154 = scmp.eq.s32.totalorder %s19, 0
      %p155 = por %p153, %p154
      %p156 = scmp.ne.s32.totalorder %s144, %s145
      %p157 = scmp.eq.s32.totalorder %s20, 1
      %p158 = por %p156, %p157
      %p160 = scmp.ne.s32.totalorder %s145, %s159
      %p161 = scmp.eq.s32.totalorder %s20, 0
      %p162 = por %p160, %p161
      %s164 = sadd.s32 %s163, 1
      %p167 = scmp.eq.s32.totalorder %s14, 1
      %p168 = scmp.ne.s32.totalorder %s163, %s165
      %p169 = scmp.eq.s32.totalorder %s14, 0
      %p170 = por %p168, %p169
      %p171 = scmp.ne.s32.totalorder %s163, %s165
      %p172 = scmp.eq.s32.totalorder %s19, 1
      %p173 = por %p171, %p172
      %p174 = scmp.ne.s32.totalorder %s165, %s166
      %p175 = scmp.eq.s32.totalorder %s19, 0
      %p176 = por %p174, %p175
      %p177 = scmp.ne.s32.totalorder %s165, %s166
      %p178 = scmp.eq.s32.totalorder %s20, 1
      %p179 = por %p177, %p178
      %p181 = scmp.ne.s32.totalorder %s166, %s180
      %p182 = scmp.eq.s32.totalorder %s20, 0
      %p183 = por %p181, %p182
      %s185 = sadd.s32 %s184, 1
      %p188 = scmp.eq.s32.totalorder %s14, 1
      %p189 = scmp.ne.s32.totalorder %s184, %s186
      %p190 = scmp.eq.s32.totalorder %s14, 0
      %p191 = por %p189, %p190
      %p192 = scmp.ne.s32.totalorder %s184, %s186
      %p193 = scmp.eq.s32.totalorder %s19, 1
      %p194 = por %p192, %p193
      %p195 = scmp.ne.s32.totalorder %s186, %s187
      %p196 = scmp.eq.s32.totalorder %s19, 0
      %p197 = por %p195, %p196
      %p198 = scmp.ne.s32.totalorder %s186, %s187
      %p199 = scmp.eq.s32.totalorder %s20, 1
      %p200 = por %p198, %p199
      %p202 = scmp.ne.s32.totalorder %s187, %s201
      %p203 = scmp.eq.s32.totalorder %s20, 0
      %p204 = por %p202, %p203
      %p205 = scmp.le.s32.totalorder 1, %s14
      %p206 = scmp.lt.s32.totalorder %s14, 3
      %p207 = pnand %p205, %p206
      %p208 = pneg %p207
      // Predicated region
      $region9: #{tpu_custom_call.1} parent=5 // pred_check
        _
      $region10: #{tpu_custom_call.1} parent=5 // pred_check_branch
        %210 = sbr.rel (%p207) target = $region12
      $region11: #{tpu_custom_call.1} parent=5 // pred_region
        %s211 = ssub.s32 %s14, 1
        // Predicated region
        $region13: #{tpu_custom_call.1} parent=11 // pred_check
          %p212 = pneg %p113
        $region14: #{tpu_custom_call.1} parent=11 // pred_check_branch
          %214 = sbr.rel (%p212) target = $region16
        $region15: #{tpu_custom_call.1} parent=11 // pred_region
          _
        $region16: #{tpu_custom_call.1} parent=11 // pred_fallthru
          _
        // Predicated region
        $region17: #{tpu_custom_call.1} parent=11 // pred_check
          %p215 = pneg %p134
        $region18: #{tpu_custom_call.1} parent=11 // pred_check_branch
          %217 = sbr.rel (%p215) target = $region20
        $region19: #{tpu_custom_call.1} parent=11 // pred_region
          _
        $region20: #{tpu_custom_call.1} parent=11 // pred_fallthru
          _
        // Predicated region
        $region21: #{tpu_custom_call.1} parent=11 // pred_check
          %p218 = pneg %p155
        $region22: #{tpu_custom_call.1} parent=11 // pred_check_branch
          %220 = sbr.rel (%p218) target = $region24
        $region23: #{tpu_custom_call.1} parent=11 // pred_region
          _
        $region24: #{tpu_custom_call.1} parent=11 // pred_fallthru
          _
        // Predicated region
        $region25: #{tpu_custom_call.1} parent=11 // pred_check
          %p221 = pneg %p176
        $region26: #{tpu_custom_call.1} parent=11 // pred_check_branch
          %223 = sbr.rel (%p221) target = $region28
        $region27: #{tpu_custom_call.1} parent=11 // pred_region
          _
        $region28: #{tpu_custom_call.1} parent=11 // pred_fallthru
          _
      $region12: #{tpu_custom_call.1} parent=5 // pred_fallthru
        _
      %p224 = scmp.lt.s32.totalorder %s14, 2
      // Predicated region
      $region29: #{tpu_custom_call.1} parent=5 // pred_check
        %p225 = pneg %p224
      $region30: #{tpu_custom_call.1} parent=5 // pred_check_branch
        %227 = sbr.rel (%p225) target = $region32
      $region31: #{tpu_custom_call.1} parent=5 // pred_region
        // Predicated region
        $region33: #{tpu_custom_call.1} parent=31 // pred_check
          %p228 = pneg %p34
        $region34: #{tpu_custom_call.1} parent=31 // pred_check_branch
          %230 = sbr.rel (%p228) target = $region36
        $region35: #{tpu_custom_call.1} parent=31 // pred_region
          %s231 = smul.u32 16, %s14
          %p232 = scmp.lt.s32.totalorder %s231, 31
          %s233 = scalar_select %p232, %s231, 31
          %s234 = smul.addr %s233, 4
          %s235 = scalar_lea.vmem %s0, %s234
          %s236 = smul.u32 16, %s14
        $region36: #{tpu_custom_call.1} parent=31 // pred_fallthru
          _
        // Predicated region
        $region37: #{tpu_custom_call.1} parent=31 // pred_check
          %p237 = pneg %p60
        $region38: #{tpu_custom_call.1} parent=31 // pred_check_branch
          %239 = sbr.rel (%p237) target = $region40
        $region39: #{tpu_custom_call.1} parent=31 // pred_region
          %s240 = smul.u32 16, %s14
          %p241 = scmp.lt.s32.totalorder %s240, 31
          %s242 = scalar_select %p241, %s240, 31
          %s243 = smul.addr %s242, 8
          %s244 = scalar_lea.vmem %s1, %s243
          %s245 = smul.u32 16, %s14
        $region40: #{tpu_custom_call.1} parent=31 // pred_fallthru
          _
        // Predicated region
        $region41: #{tpu_custom_call.1} parent=31 // pred_check
          %p246 = pneg %p86
        $region42: #{tpu_custom_call.1} parent=31 // pred_check_branch
          %248 = sbr.rel (%p246) target = $region44
        $region43: #{tpu_custom_call.1} parent=31 // pred_region
          %s249 = smul.u32 16, %s14
          %p250 = scmp.lt.s32.totalorder %s249, 31
          %s251 = scalar_select %p250, %s249, 31
          %s252 = smul.addr %s251, 8
          %s253 = scalar_lea.vmem %s2, %s252
          %s254 = smul.u32 16, %s14
        $region44: #{tpu_custom_call.1} parent=31 // pred_fallthru
          _
      $region32: #{tpu_custom_call.1} parent=5 // pred_fallthru
        _
      %p255 = scmp.le.s32.totalorder 1, %s14
      %p256 = scmp.lt.s32.totalorder %s14, 3
      %p257 = pnand %p255, %p256
      %p258 = pneg %p257
      // Predicated region
      $region45: #{tpu_custom_call.1} parent=5 // pred_check
        _
      $region46: #{tpu_custom_call.1} parent=5 // pred_check_branch
        %260 = sbr.rel (%p257) target = $region48
      $region47: #{tpu_custom_call.1} parent=5 // pred_region
        %s261 = ssub.s32 %s14, 1
        %s262 = smul.u32 16, %s19
        %p263 = scmp.lt.s32.totalorder %s262, 31
        %s264 = scalar_select %p263, %s262, 31
        %s265 = smul.addr %s264, 4
        %s266 = scalar_lea.vmem %s0, %s265
        %p267 = pneg %p40
        %p268 = pneg %p37
        %s269 = smul.u32 16, %s19
        %p270 = scmp.lt.s32.totalorder %s269, 31
        %s271 = scalar_select %p270, %s269, 31
        %s272 = smul.addr %s271, 8
        %s273 = scalar_lea.vmem %s1, %s272
        %p274 = pneg %p66
        %p275 = pneg %p63
        %s276 = smul.u32 16, %s19
        %p277 = scmp.lt.s32.totalorder %s276, 31
        %s278 = scalar_select %p277, %s276, 31
        %s279 = smul.addr %s278, 8
        %s280 = scalar_lea.vmem %s2, %s279
        %p281 = pneg %p92
        %p282 = pneg %p89
        %p283 = pneg %p113
        %p284 = pneg %p110
        %p285 = pneg %p134
        %p286 = pneg %p131
        %p287 = pneg %p155
        %p288 = pneg %p152
        %p289 = pneg %p176
        %p290 = pneg %p173
        %p291 = pneg %p197
        %p292 = pneg %p194
        %s293 = smul.u32 16, %s19
        %p294 = scmp.lt.s32.totalorder %s293, 31
        %s295 = scalar_select %p294, %s293, 31
        %s296 = smul.addr %s295, 4
        %s297 = scalar_lea.vmem %s0, %s296
        %s298 = smul.u32 16, %s19
        %s299 = smul.u32 16, %s19
        %p300 = scmp.lt.s32.totalorder %s299, 31
        %s301 = scalar_select %p300, %s299, 31
        %s302 = smul.addr %s301, 8
        %s303 = scalar_lea.vmem %s1, %s302
        %s304 = smul.u32 16, %s19
        %s305 = smul.u32 16, %s19
        %p306 = scmp.lt.s32.totalorder %s305, 31
        %s307 = scalar_select %p306, %s305, 31
        %s308 = smul.addr %s307, 8
        %s309 = scalar_lea.vmem %s2, %s308
        %s310 = smul.u32 16, %s19
        %p312 = scmp.eq.s32.totalorder %s19, 0
        // Predicated region
        $region49: #{tpu_custom_call.1} parent=47 // pred_check
          %p313 = pneg %p312
        $region50: #{tpu_custom_call.1} parent=47 // pred_check_branch
          %315 = sbr.rel (%p313) target = $region52
        $region51: #{tpu_custom_call.1} parent=47 // pred_region
          %vm316 = vcmask 0
          %317 = vst.msk [vmem:[#allocation2] sm:$0x1] %vm316, 0.0
        $region52: #{tpu_custom_call.1} parent=47 // pred_fallthru
          _
        %v318 = vld [vmem:[%s297] sm:$0xf]
        %v319 = vld [vmem:[%s297 + $0x4] sm:$0xf]
        %v320 = vld [vmem:[%s297 + $0x8] sm:$0xf]
        %v321 = vld [vmem:[%s297 + $0xc] sm:$0xf]
        %v322 = vld [vmem:[%s297 + $0x10] sm:$0xf]
        %v323 = vld [vmem:[%s297 + $0x14] sm:$0xf]
        %v324 = vld [vmem:[%s297 + $0x18] sm:$0xf]
        %v325 = vld [vmem:[%s297 + $0x1c] sm:$0xf]
        %v326 = vld [vmem:[%s297 + $0x20] sm:$0xf]
        %v327 = vld [vmem:[%s297 + $0x24] sm:$0xf]
        %v328 = vld [vmem:[%s297 + $0x28] sm:$0xf]
        %v329 = vld [vmem:[%s297 + $0x2c] sm:$0xf]
        %v330 = vld [vmem:[%s297 + $0x30] sm:$0xf]
        %v331 = vld [vmem:[%s297 + $0x34] sm:$0xf]
        %v332 = vld [vmem:[%s297 + $0x38] sm:$0xf]
        %v333 = vld [vmem:[%s297 + $0x3c] sm:$0xf]
        %v334 = vld [vmem:[%s3] sm:$0xf]
        %v335 = vld [vmem:[%s3 + $0x4] sm:$0xf]
        %v336 = vld [vmem:[%s3 + $0x8] sm:$0xf]
        %v337 = vld [vmem:[%s3 + $0xc] sm:$0xf]
        %v338 = vld [vmem:[%s4] sm:$0x1]
        %v340 = vlaneseq
        %v341 = vshrl.u32 %v340, 7
        %v342 = vsub.s32 0, %v341
        %v343 = vrot.slane %v338, %v342
        %v361 = vunpack.c.l.b16 %v318
        %v362 = vunpack.c.l.b16 %v319
        %v363 = vunpack.c.l.b16 %v320
        %v364 = vunpack.c.l.b16 %v321
        %v365 = vunpack.c.l.b16 %v322
        %v366 = vunpack.c.l.b16 %v323
        %v367 = vunpack.c.l.b16 %v324
        %v368 = vunpack.c.l.b16 %v325
        %v369 = vunpack.c.l.b16 %v326
        %v370 = vunpack.c.l.b16 %v327
        %v371 = vunpack.c.l.b16 %v328
        %v372 = vunpack.c.l.b16 %v329
        %v373 = vunpack.c.l.b16 %v330
        %v374 = vunpack.c.l.b16 %v331
        %v375 = vunpack.c.l.b16 %v332
        %v376 = vunpack.c.l.b16 %v333
        %v377 = vpack.c.b16 %v362, %v361
        %v378 = vpack.c.b16 %v364, %v363
        %v379 = vpack.c.b16 %v366, %v365
        %v380 = vpack.c.b16 %v368, %v367
        %v381 = vpack.c.b16 %v370, %v369
        %v382 = vpack.c.b16 %v372, %v371
        %v383 = vpack.c.b16 %v374, %v373
        %v384 = vpack.c.b16 %v376, %v375
        %v389 = vunpack.c.l.b16 %v334
        %v390 = vunpack.c.l.b16 %v335
        %v391 = vunpack.c.l.b16 %v336
        %v392 = vunpack.c.l.b16 %v337
        %v393 = vpack.c.b16 %v390, %v389
        %v394 = vpack.c.b16 %v392, %v391
        %vm397 = vcmask 261120
        %v399 = vsel %vm397, %v377, 0
        %v402 = vsel %vm397, %v378, 0
        %v405 = vsel %vm397, %v379, 0
        %v408 = vsel %vm397, %v380, 0
        %v411 = vsel %vm397, %v381, 0
        %v414 = vsel %vm397, %v382, 0
        %v417 = vsel %vm397, %v383, 0
        %v420 = vsel %vm397, %v384, 0
        %422 = vmatprep.subr.bf16.mxu0 0
        %423 = vmatpush1.bf16.msra.mxu0 %v393
        %424 = vmatprep.subr.bf16.mxu0 0
        %425 = vmatpush1.bf16.msra.mxu0 %v394
        %426 = vmatprep.subr.bf16.mxu0 0
        %427 = vmatpush1.bf16.msra.mxu0 0
        %428 = vmatprep.subr.bf16.mxu0 0
        %429 = vmatpush1.bf16.msra.mxu0 0
        %430 = vmatprep.subr.bf16.mxu0 0
        %431 = vmatpush1.bf16.msra.mxu0 0
        %432 = vmatprep.subr.bf16.mxu0 0
        %433 = vmatpush1.bf16.msra.mxu0 0
        %434 = vmatprep.subr.bf16.mxu0 0
        %435 = vmatpush1.bf16.msra.mxu0 0
        %436 = vmatprep.subr.bf16.mxu0 0
        %437 = vmatpush1.bf16.msra.mxu0 0
        %438 = vmatprep.subr.bf16.mxu0 0
        %439 = vmatpush1.bf16.msra.mxu0 0
        %440 = vmatprep.subr.bf16.mxu0 0
        %441 = vmatpush1.bf16.msra.mxu0 0
        %442 = vmatprep.subr.bf16.mxu0 0
        %443 = vmatpush1.bf16.msra.mxu0 0
        %444 = vmatprep.subr.bf16.mxu0 0
        %445 = vmatpush1.bf16.msra.mxu0 0
        %446 = vmatprep.subr.bf16.mxu0 0
        %447 = vmatpush1.bf16.msra.mxu0 0
        %448 = vmatprep.subr.bf16.mxu0 0
        %449 = vmatpush1.bf16.msra.mxu0 0
        %450 = vmatprep.subr.bf16.mxu0 0
        %451 = vmatpush1.bf16.msra.mxu0 0
        %452 = vmatprep.subr.bf16.mxu0 0
        %453 = vmatpush1.bf16.msra.mxu0 0
        %454 = vmatprep.mubr.bf16.mxu0 0
        %455 = vmatmul.mubr.bf16.gmra.mrb[0].mxu0 %v399
        %v456 = vpop.f32.mrb[0].mxu0
        %v457 = vadd.f32 %v343, %v456
        %v458 = vpop.f32.mrb[0].mxu0
        %v459 = vpop.f32.mrb[0].mxu0
        %v460 = vadd.f32 %v343, %v459
        %v461 = vpop.f32.mrb[0].mxu0
        %462 = vmatprep.mubr.bf16.mxu0 0
        %463 = vmatmul.mubr.bf16.gmra.mrb[0].mxu0 %v402
        %v464 = vpop.f32.mrb[0].mxu0
        %v465 = vadd.f32 %v343, %v464
        %v466 = vpop.f32.mrb[0].mxu0
        %v467 = vpop.f32.mrb[0].mxu0
        %v468 = vadd.f32 %v343, %v467
        %v469 = vpop.f32.mrb[0].mxu0
        %470 = vmatprep.mubr.bf16.mxu0 0
        %471 = vmatmul.mubr.bf16.gmra.mrb[0].mxu0 %v405
        %v472 = vpop.f32.mrb[0].mxu0
        %v473 = vadd.f32 %v343, %v472
        %v474 = vpop.f32.mrb[0].mxu0
        %v475 = vpop.f32.mrb[0].mxu0
        %v476 = vadd.f32 %v343, %v475
        %v477 = vpop.f32.mrb[0].mxu0
        %478 = vmatprep.mubr.bf16.mxu0 0
        %479 = vmatmul.mubr.bf16.gmra.mrb[0].mxu0 %v408
        %v480 = vpop.f32.mrb[0].mxu0
        %v481 = vadd.f32 %v343, %v480
        %v482 = vpop.f32.mrb[0].mxu0
        %v483 = vpop.f32.mrb[0].mxu0
        %v484 = vadd.f32 %v343, %v483
        %v485 = vpop.f32.mrb[0].mxu0
        %486 = vmatprep.mubr.bf16.mxu0 0
        %487 = vmatmul.mubr.bf16.gmra.mrb[0].mxu0 %v411
        %v488 = vpop.f32.mrb[0].mxu0
        %v489 = vadd.f32 %v343, %v488
        %v490 = vpop.f32.mrb[0].mxu0
        %v491 = vpop.f32.mrb[0].mxu0
        %v492 = vadd.f32 %v343, %v491
        %v493 = vpop.f32.mrb[0].mxu0
        %494 = vmatprep.mubr.bf16.mxu0 0
        %495 = vmatmul.mubr.bf16.gmra.mrb[0].mxu0 %v414
        %v496 = vpop.f32.mrb[0].mxu0
        %v497 = vadd.f32 %v343, %v496
        %v498 = vpop.f32.mrb[0].mxu0
        %v499 = vpop.f32.mrb[0].mxu0
        %v500 = vadd.f32 %v343, %v499
        %v501 = vpop.f32.mrb[0].mxu0
        %502 = vmatprep.mubr.bf16.mxu0 0
        %503 = vmatmul.mubr.bf16.gmra.mrb[0].mxu0 %v417
        %v504 = vpop.f32.mrb[0].mxu0
        %v505 = vadd.f32 %v343, %v504
        %v506 = vpop.f32.mrb[0].mxu0
        %v507 = vpop.f32.mrb[0].mxu0
        %v508 = vadd.f32 %v343, %v507
        %v509 = vpop.f32.mrb[0].mxu0
        %510 = vmatprep.mubr.bf16.mxu0 0
        %511 = vmatmul.mubr.bf16.gmra.mrb[0].mxu0 %v420
        %v512 = vpop.f32.mrb[0].mxu0
        %v513 = vadd.f32 %v343, %v512
        %v514 = vpop.f32.mrb[0].mxu0
        %v515 = vpop.f32.mrb[0].mxu0
        %v516 = vadd.f32 %v343, %v515
        %v517 = vpop.f32.mrb[0].mxu0
        %518 = vdwg.mxu0
        %v519 = vmax.f32 %v457, 0.0
        %v520 = vmax.f32 %v460, 0.0
        %v521 = vmax.f32 %v465, 0.0
        %v522 = vmax.f32 %v468, 0.0
        %v523 = vmax.f32 %v473, 0.0
        %v524 = vmax.f32 %v476, 0.0
        %v525 = vmax.f32 %v481, 0.0
        %v526 = vmax.f32 %v484, 0.0
        %v527 = vmax.f32 %v489, 0.0
        %v528 = vmax.f32 %v492, 0.0
        %v529 = vmax.f32 %v497, 0.0
        %v530 = vmax.f32 %v500, 0.0
        %v531 = vmax.f32 %v505, 0.0
        %v532 = vmax.f32 %v508, 0.0
        %v533 = vmax.f32 %v513, 0.0
        %v534 = vmax.f32 %v516, 0.0
        %v535 = vpack.c.bf16 %v520, %v519
        %v536 = vpack.c.bf16 %v522, %v521
        %v537 = vpack.c.bf16 %v524, %v523
        %v538 = vpack.c.bf16 %v526, %v525
        %v539 = vpack.c.bf16 %v528, %v527
        %v540 = vpack.c.bf16 %v530, %v529
        %v541 = vpack.c.bf16 %v532, %v531
        %v542 = vpack.c.bf16 %v534, %v533
        %v543 = vld [vmem:[%s5] sm:$0xf]
        %v544 = vld [vmem:[%s5 + $0x4] sm:$0xf]
        %v545 = vld [vmem:[%s5 + $0x8] sm:$0xf]
        %v546 = vld [vmem:[%s5 + $0xc] sm:$0xf]
        %v547 = vld [vmem:[%s6] sm:$0x1]
        %v549 = vlaneseq
        %v550 = vshrl.u32 %v549, 7
        %v551 = vsub.s32 0, %v550
        %v552 = vrot.slane %v547, %v551
        %v558 = vunpack.c.l.b16 %v543
        %v559 = vunpack.c.l.b16 %v544
        %v560 = vunpack.c.l.b16 %v545
        %v561 = vunpack.c.l.b16 %v546
        %v562 = vpack.c.b16 %v559, %v558
        %v563 = vpack.c.b16 %v561, %v560
        %v567 = vsel %vm397, %v535, 0
        %v570 = vsel %vm397, %v536, 0
        %v573 = vsel %vm397, %v537, 0
        %v576 = vsel %vm397, %v538, 0
        %v579 = vsel %vm397, %v539, 0
        %v582 = vsel %vm397, %v540, 0
        %v585 = vsel %vm397, %v541, 0
        %v588 = vsel %vm397, %v542, 0
        %590 = vmatprep.subr.bf16.mxu0 0
        %591 = vmatpush1.bf16.msra.mxu0 %v562
        %592 = vmatprep.subr.bf16.mxu0 0
        %593 = vmatpush1.bf16.msra.mxu0 %v563
        %594 = vmatprep.subr.bf16.mxu0 0
        %595 = vmatpush1.bf16.msra.mxu0 0
        %596 = vmatprep.subr.bf16.mxu0 0
        %597 = vmatpush1.bf16.msra.mxu0 0
        %598 = vmatprep.subr.bf16.mxu0 0
        %599 = vmatpush1.bf16.msra.mxu0 0
        %600 = vmatprep.subr.bf16.mxu0 0
        %601 = vmatpush1.bf16.msra.mxu0 0
        %602 = vmatprep.subr.bf16.mxu0 0
        %603 = vmatpush1.bf16.msra.mxu0 0
        %604 = vmatprep.subr.bf16.mxu0 0
        %605 = vmatpush1.bf16.msra.mxu0 0
        %606 = vmatprep.subr.bf16.mxu0 0
        %607 = vmatpush1.bf16.msra.mxu0 0
        %608 = vmatprep.subr.bf16.mxu0 0
        %609 = vmatpush1.bf16.msra.mxu0 0
        %610 = vmatprep.subr.bf16.mxu0 0
        %611 = vmatpush1.bf16.msra.mxu0 0
        %612 = vmatprep.subr.bf16.mxu0 0
        %613 = vmatpush1.bf16.msra.mxu0 0
        %614 = vmatprep.subr.bf16.mxu0 0
        %615 = vmatpush1.bf16.msra.mxu0 0
        %616 = vmatprep.subr.bf16.mxu0 0
        %617 = vmatpush1.bf16.msra.mxu0 0
        %618 = vmatprep.subr.bf16.mxu0 0
        %619 = vmatpush1.bf16.msra.mxu0 0
        %620 = vmatprep.subr.bf16.mxu0 0
        %621 = vmatpush1.bf16.msra.mxu0 0
        %622 = vmatprep.mubr.bf16.mxu0 0
        %623 = vmatmul.mubr.bf16.gmra.mrb[0].mxu0 %v567
        %v624 = vpop.f32.mrb[0].mxu0
        %v625 = vadd.f32 %v552, %v624
        %v626 = vpop.f32.mrb[0].mxu0
        %v627 = vpop.f32.mrb[0].mxu0
        %v628 = vadd.f32 %v552, %v627
        %v629 = vpop.f32.mrb[0].mxu0
        %630 = vmatprep.mubr.bf16.mxu0 0
        %631 = vmatmul.mubr.bf16.gmra.mrb[0].mxu0 %v570
        %v632 = vpop.f32.mrb[0].mxu0
        %v633 = vadd.f32 %v552, %v632
        %v634 = vpop.f32.mrb[0].mxu0
        %v635 = vpop.f32.mrb[0].mxu0
        %v636 = vadd.f32 %v552, %v635
        %v637 = vpop.f32.mrb[0].mxu0
        %638 = vmatprep.mubr.bf16.mxu0 0
        %639 = vmatmul.mubr.bf16.gmra.mrb[0].mxu0 %v573
        %v640 = vpop.f32.mrb[0].mxu0
        %v641 = vadd.f32 %v552, %v640
        %v642 = vpop.f32.mrb[0].mxu0
        %v643 = vpop.f32.mrb[0].mxu0
        %v644 = vadd.f32 %v552, %v643
        %v645 = vpop.f32.mrb[0].mxu0
        %646 = vmatprep.mubr.bf16.mxu0 0
        %647 = vmatmul.mubr.bf16.gmra.mrb[0].mxu0 %v576
        %v648 = vpop.f32.mrb[0].mxu0
        %v649 = vadd.f32 %v552, %v648
        %v650 = vpop.f32.mrb[0].mxu0
        %v651 = vpop.f32.mrb[0].mxu0
        %v652 = vadd.f32 %v552, %v651
        %v653 = vpop.f32.mrb[0].mxu0
        %654 = vmatprep.mubr.bf16.mxu0 0
        %655 = vmatmul.mubr.bf16.gmra.mrb[0].mxu0 %v579
        %v656 = vpop.f32.mrb[0].mxu0
        %v657 = vadd.f32 %v552, %v656
        %v658 = vpop.f32.mrb[0].mxu0
        %v659 = vpop.f32.mrb[0].mxu0
        %v660 = vadd.f32 %v552, %v659
        %v661 = vpop.f32.mrb[0].mxu0
        %662 = vmatprep.mubr.bf16.mxu0 0
        %663 = vmatmul.mubr.bf16.gmra.mrb[0].mxu0 %v582
        %v664 = vpop.f32.mrb[0].mxu0
        %v665 = vadd.f32 %v552, %v664
        %v666 = vpop.f32.mrb[0].mxu0
        %v667 = vpop.f32.mrb[0].mxu0
        %v668 = vadd.f32 %v552, %v667
        %v669 = vpop.f32.mrb[0].mxu0
        %670 = vmatprep.mubr.bf16.mxu0 0
        %671 = vmatmul.mubr.bf16.gmra.mrb[0].mxu0 %v585
        %v672 = vpop.f32.mrb[0].mxu0
        %v673 = vadd.f32 %v552, %v672
        %v674 = vpop.f32.mrb[0].mxu0
        %v675 = vpop.f32.mrb[0].mxu0
        %v676 = vadd.f32 %v552, %v675
        %v677 = vpop.f32.mrb[0].mxu0
        %678 = vmatprep.mubr.bf16.mxu0 0
        %679 = vmatmul.mubr.bf16.gmra.mrb[0].mxu0 %v588
        %v680 = vpop.f32.mrb[0].mxu0
        %v681 = vadd.f32 %v552, %v680
        %v682 = vpop.f32.mrb[0].mxu0
        %v683 = vpop.f32.mrb[0].mxu0
        %v684 = vadd.f32 %v552, %v683
        %v685 = vpop.f32.mrb[0].mxu0
        %686 = vdwg.mxu0
        %v687 = vtanh.pop %v625
        %v688 = vtanh.pop %v628
        %v689 = vtanh.pop %v633
        %v690 = vtanh.pop %v636
        %v691 = vtanh.pop %v641
        %v692 = vtanh.pop %v644
        %v693 = vtanh.pop %v649
        %v694 = vtanh.pop %v652
        %v695 = vtanh.pop %v657
        %v696 = vtanh.pop %v660
        %v697 = vtanh.pop %v665
        %v698 = vtanh.pop %v668
        %v699 = vtanh.pop %v673
        %v700 = vtanh.pop %v676
        %v701 = vtanh.pop %v681
        %v702 = vtanh.pop %v684
        %v703 = vsub.f32 0.0, %v687
        %v704 = vsub.f32 0.0, %v688
        %v705 = vsub.f32 0.0, %v689
        %v706 = vsub.f32 0.0, %v690
        %v707 = vsub.f32 0.0, %v691
        %v708 = vsub.f32 0.0, %v692
        %v709 = vsub.f32 0.0, %v693
        %v710 = vsub.f32 0.0, %v694
        %v711 = vsub.f32 0.0, %v695
        %v712 = vsub.f32 0.0, %v696
        %v713 = vsub.f32 0.0, %v697
        %v714 = vsub.f32 0.0, %v698
        %v715 = vsub.f32 0.0, %v699
        %v716 = vsub.f32 0.0, %v700
        %v717 = vsub.f32 0.0, %v701
        %v718 = vsub.f32 0.0, %v702
        %v719 = vmul.f32 %v703, 1.442695
        %v720 = vpow.pop %v719
        %v721 = vmul.f32 %v704, 1.442695
        %v722 = vpow.pop %v721
        %v723 = vmul.f32 %v705, 1.442695
        %v724 = vpow.pop %v723
        %v725 = vmul.f32 %v706, 1.442695
        %v726 = vpow.pop %v725
        %v727 = vmul.f32 %v707, 1.442695
        %v728 = vpow.pop %v727
        %v729 = vmul.f32 %v708, 1.442695
        %v730 = vpow.pop %v729
        %v731 = vmul.f32 %v709, 1.442695
        %v732 = vpow.pop %v731
        %v733 = vmul.f32 %v710, 1.442695
        %v734 = vpow.pop %v733
        %v735 = vmul.f32 %v711, 1.442695
        %v736 = vpow.pop %v735
        %v737 = vmul.f32 %v712, 1.442695
        %v738 = vpow.pop %v737
        %v739 = vmul.f32 %v713, 1.442695
        %v740 = vpow.pop %v739
        %v741 = vmul.f32 %v714, 1.442695
        %v742 = vpow.pop %v741
        %v743 = vmul.f32 %v715, 1.442695
        %v744 = vpow.pop %v743
        %v745 = vmul.f32 %v716, 1.442695
        %v746 = vpow.pop %v745
        %v747 = vmul.f32 %v717, 1.442695
        %v748 = vpow.pop %v747
        %v749 = vmul.f32 %v718, 1.442695
        %v750 = vpow.pop %v749
        %v751 = vld [vmem:[%s303] sm:$0xff]
        %v752 = vld [vmem:[%s303 + $0x8] sm:$0xff]
        %v753 = vld [vmem:[%s303 + $0x10] sm:$0xff]
        %v754 = vld [vmem:[%s303 + $0x18] sm:$0xff]
        %v755 = vld [vmem:[%s303 + $0x20] sm:$0xff]
        %v756 = vld [vmem:[%s303 + $0x28] sm:$0xff]
        %v757 = vld [vmem:[%s303 + $0x30] sm:$0xff]
        %v758 = vld [vmem:[%s303 + $0x38] sm:$0xff]
        %v759 = vld [vmem:[%s303 + $0x40] sm:$0xff]
        %v760 = vld [vmem:[%s303 + $0x48] sm:$0xff]
        %v761 = vld [vmem:[%s303 + $0x50] sm:$0xff]
        %v762 = vld [vmem:[%s303 + $0x58] sm:$0xff]
        %v763 = vld [vmem:[%s303 + $0x60] sm:$0xff]
        %v764 = vld [vmem:[%s303 + $0x68] sm:$0xff]
        %v765 = vld [vmem:[%s303 + $0x70] sm:$0xff]
        %v766 = vld [vmem:[%s303 + $0x78] sm:$0xff]
        %v767 = vld [vmem:[%s309] sm:$0xff]
        %v768 = vld [vmem:[%s309 + $0x8] sm:$0xff]
        %v769 = vld [vmem:[%s309 + $0x10] sm:$0xff]
        %v770 = vld [vmem:[%s309 + $0x18] sm:$0xff]
        %v771 = vld [vmem:[%s309 + $0x20] sm:$0xff]
        %v772 = vld [vmem:[%s309 + $0x28] sm:$0xff]
        %v773 = vld [vmem:[%s309 + $0x30] sm:$0xff]
        %v774 = vld [vmem:[%s309 + $0x38] sm:$0xff]
        %v775 = vld [vmem:[%s309 + $0x40] sm:$0xff]
        %v776 = vld [vmem:[%s309 + $0x48] sm:$0xff]
        %v777 = vld [vmem:[%s309 + $0x50] sm:$0xff]
        %v778 = vld [vmem:[%s309 + $0x58] sm:$0xff]
        %v779 = vld [vmem:[%s309 + $0x60] sm:$0xff]
        %v780 = vld [vmem:[%s309 + $0x68] sm:$0xff]
        %v781 = vld [vmem:[%s309 + $0x70] sm:$0xff]
        %v782 = vld [vmem:[%s309 + $0x78] sm:$0xff]
        %v783 = vsub.f32 %v751, %v767
        %v784 = vsub.f32 %v752, %v768
        %v785 = vsub.f32 %v753, %v769
        %v786 = vsub.f32 %v754, %v770
        %v787 = vsub.f32 %v755, %v771
        %v788 = vsub.f32 %v756, %v772
        %v789 = vsub.f32 %v757, %v773
        %v790 = vsub.f32 %v758, %v774
        %v791 = vsub.f32 %v759, %v775
        %v792 = vsub.f32 %v760, %v776
        %v793 = vsub.f32 %v761, %v777
        %v794 = vsub.f32 %v762, %v778
        %v795 = vsub.f32 %v763, %v779
        %v796 = vsub.f32 %v764, %v780
        %v797 = vsub.f32 %v765, %v781
        %v798 = vsub.f32 %v766, %v782
        %815 = vrot.lane.b32.xlu0 %v783, 16
        %v816 = vpop.permute.xlu0 %815
        %817 = vrot.lane.b32.xlu0 %v784, 16
        %v818 = vpop.permute.xlu0 %817
        %819 = vrot.lane.b32.xlu0 %v785, 16
        %v820 = vpop.permute.xlu0 %819
        %821 = vrot.lane.b32.xlu0 %v786, 16
        %v822 = vpop.permute.xlu0 %821
        %823 = vrot.lane.b32.xlu0 %v787, 16
        %v824 = vpop.permute.xlu0 %823
        %825 = vrot.lane.b32.xlu0 %v788, 16
        %v826 = vpop.permute.xlu0 %825
        %827 = vrot.lane.b32.xlu0 %v789, 16
        %v828 = vpop.permute.xlu0 %827
        %829 = vrot.lane.b32.xlu0 %v790, 16
        %v830 = vpop.permute.xlu0 %829
        %831 = vrot.lane.b32.xlu0 %v791, 16
        %v832 = vpop.permute.xlu0 %831
        %833 = vrot.lane.b32.xlu0 %v792, 16
        %v834 = vpop.permute.xlu0 %833
        %835 = vrot.lane.b32.xlu0 %v793, 16
        %v836 = vpop.permute.xlu0 %835
        %837 = vrot.lane.b32.xlu0 %v794, 16
        %v838 = vpop.permute.xlu0 %837
        %839 = vrot.lane.b32.xlu0 %v795, 16
        %v840 = vpop.permute.xlu0 %839
        %841 = vrot.lane.b32.xlu0 %v796, 16
        %v842 = vpop.permute.xlu0 %841
        %843 = vrot.lane.b32.xlu0 %v797, 16
        %v844 = vpop.permute.xlu0 %843
        %845 = vrot.lane.b32.xlu0 %v798, 16
        %v846 = vpop.permute.xlu0 %845
        %v863 = vmul.f32 %v720, %v816
        %v864 = vmul.f32 %v722, %v818
        %v865 = vmul.f32 %v724, %v820
        %v866 = vmul.f32 %v726, %v822
        %v867 = vmul.f32 %v728, %v824
        %v868 = vmul.f32 %v730, %v826
        %v869 = vmul.f32 %v732, %v828
        %v870 = vmul.f32 %v734, %v830
        %v871 = vmul.f32 %v736, %v832
        %v872 = vmul.f32 %v738, %v834
        %v873 = vmul.f32 %v740, %v836
        %v874 = vmul.f32 %v742, %v838
        %v875 = vmul.f32 %v744, %v840
        %v876 = vmul.f32 %v746, %v842
        %v877 = vmul.f32 %v748, %v844
        %v878 = vmul.f32 %v750, %v846
        %v879 = vmul.f32 %v625, 2.0
        %v880 = vmul.f32 %v628, 2.0
        %v881 = vmul.f32 %v633, 2.0
        %v882 = vmul.f32 %v636, 2.0
        %v883 = vmul.f32 %v641, 2.0
        %v884 = vmul.f32 %v644, 2.0
        %v885 = vmul.f32 %v649, 2.0
        %v886 = vmul.f32 %v652, 2.0
        %v887 = vmul.f32 %v657, 2.0
        %v888 = vmul.f32 %v660, 2.0
        %v889 = vmul.f32 %v665, 2.0
        %v890 = vmul.f32 %v668, 2.0
        %v891 = vmul.f32 %v673, 2.0
        %v892 = vmul.f32 %v676, 2.0
        %v893 = vmul.f32 %v681, 2.0
        %v894 = vmul.f32 %v684, 2.0
        %v895 = vsub.f32 %v879, %v751
        %v896 = vsub.f32 %v880, %v752
        %v897 = vsub.f32 %v881, %v753
        %v898 = vsub.f32 %v882, %v754
        %v899 = vsub.f32 %v883, %v755
        %v900 = vsub.f32 %v884, %v756
        %v901 = vsub.f32 %v885, %v757
        %v902 = vsub.f32 %v886, %v758
        %v903 = vsub.f32 %v887, %v759
        %v904 = vsub.f32 %v888, %v760
        %v905 = vsub.f32 %v889, %v761
        %v906 = vsub.f32 %v890, %v762
        %v907 = vsub.f32 %v891, %v763
        %v908 = vsub.f32 %v892, %v764
        %v909 = vsub.f32 %v893, %v765
        %v910 = vsub.f32 %v894, %v766
        %v911 = vsub.f32 %v895, %v767
        %v912 = vsub.f32 %v896, %v768
        %v913 = vsub.f32 %v897, %v769
        %v914 = vsub.f32 %v898, %v770
        %v915 = vsub.f32 %v899, %v771
        %v916 = vsub.f32 %v900, %v772
        %v917 = vsub.f32 %v901, %v773
        %v918 = vsub.f32 %v902, %v774
        %v919 = vsub.f32 %v903, %v775
        %v920 = vsub.f32 %v904, %v776
        %v921 = vsub.f32 %v905, %v777
        %v922 = vsub.f32 %v906, %v778
        %v923 = vsub.f32 %v907, %v779
        %v924 = vsub.f32 %v908, %v780
        %v925 = vsub.f32 %v909, %v781
        %v926 = vsub.f32 %v910, %v782
        %943 = vrot.lane.b32.xlu0 %v911, 16
        %v944 = vpop.permute.xlu0 %943
        %945 = vrot.lane.b32.xlu0 %v912, 16
        %v946 = vpop.permute.xlu0 %945
        %947 = vrot.lane.b32.xlu0 %v913, 16
        %v948 = vpop.permute.xlu0 %947
        %949 = vrot.lane.b32.xlu0 %v914, 16
        %v950 = vpop.permute.xlu0 %949
        %951 = vrot.lane.b32.xlu0 %v915, 16
        %v952 = vpop.permute.xlu0 %951
        %953 = vrot.lane.b32.xlu0 %v916, 16
        %v954 = vpop.permute.xlu0 %953
        %955 = vrot.lane.b32.xlu0 %v917, 16
        %v956 = vpop.permute.xlu0 %955
        %957 = vrot.lane.b32.xlu0 %v918, 16
        %v958 = vpop.permute.xlu0 %957
        %959 = vrot.lane.b32.xlu0 %v919, 16
        %v960 = vpop.permute.xlu0 %959
        %961 = vrot.lane.b32.xlu0 %v920, 16
        %v962 = vpop.permute.xlu0 %961
        %963 = vrot.lane.b32.xlu0 %v921, 16
        %v964 = vpop.permute.xlu0 %963
        %965 = vrot.lane.b32.xlu0 %v922, 16
        %v966 = vpop.permute.xlu0 %965
        %967 = vrot.lane.b32.xlu0 %v923, 16
        %v968 = vpop.permute.xlu0 %967
        %969 = vrot.lane.b32.xlu0 %v924, 16
        %v970 = vpop.permute.xlu0 %969
        %971 = vrot.lane.b32.xlu0 %v925, 16
        %v972 = vpop.permute.xlu0 %971
        %973 = vrot.lane.b32.xlu0 %v926, 16
        %v974 = vpop.permute.xlu0 %973
        %v991 = vmul.f32 %v863, %v944
        %v992 = vmul.f32 %v864, %v946
        %v993 = vmul.f32 %v865, %v948
        %v994 = vmul.f32 %v866, %v950
        %v995 = vmul.f32 %v867, %v952
        %v996 = vmul.f32 %v868, %v954
        %v997 = vmul.f32 %v869, %v956
        %v998 = vmul.f32 %v870, %v958
        %v999 = vmul.f32 %v871, %v960
        %v1000 = vmul.f32 %v872, %v962
        %v1001 = vmul.f32 %v873, %v964
        %v1002 = vmul.f32 %v874, %v966
        %v1003 = vmul.f32 %v875, %v968
        %v1004 = vmul.f32 %v876, %v970
        %v1005 = vmul.f32 %v877, %v972
        %v1006 = vmul.f32 %v878, %v974
        %1023 = vrot.lane.b32.xlu0 %v991, 112
        %v1024 = vpop.permute.xlu0 %1023
        %1025 = vrot.lane.b32.xlu0 %v992, 112
        %v1026 = vpop.permute.xlu0 %1025
        %1027 = vrot.lane.b32.xlu0 %v993, 112
        %v1028 = vpop.permute.xlu0 %1027
        %1029 = vrot.lane.b32.xlu0 %v994, 112
        %v1030 = vpop.permute.xlu0 %1029
        %1031 = vrot.lane.b32.xlu0 %v995, 112
        %v1032 = vpop.permute.xlu0 %1031
        %1033 = vrot.lane.b32.xlu0 %v996, 112
        %v1034 = vpop.permute.xlu0 %1033
        %1035 = vrot.lane.b32.xlu0 %v997, 112
        %v1036 = vpop.permute.xlu0 %1035
        %1037 = vrot.lane.b32.xlu0 %v998, 112
        %v1038 = vpop.permute.xlu0 %1037
        %1039 = vrot.lane.b32.xlu0 %v999, 112
        %v1040 = vpop.permute.xlu0 %1039
        %1041 = vrot.lane.b32.xlu0 %v1000, 112
        %v1042 = vpop.permute.xlu0 %1041
        %1043 = vrot.lane.b32.xlu0 %v1001, 112
        %v1044 = vpop.permute.xlu0 %1043
        %1045 = vrot.lane.b32.xlu0 %v1002, 112
        %v1046 = vpop.permute.xlu0 %1045
        %1047 = vrot.lane.b32.xlu0 %v1003, 112
        %v1048 = vpop.permute.xlu0 %1047
        %1049 = vrot.lane.b32.xlu0 %v1004, 112
        %v1050 = vpop.permute.xlu0 %1049
        %1051 = vrot.lane.b32.xlu0 %v1005, 112
        %v1052 = vpop.permute.xlu0 %1051
        %1053 = vrot.lane.b32.xlu0 %v1006, 112
        %v1054 = vpop.permute.xlu0 %1053
        %vm1071 = vcmask 130048
        %v1072 = vsel %vm1071, %v1024, 0.0
        %1073 = vadd.xlane.f32.xlu0 %v1072
        %v1074 = vpop.xlane.xlu0 %1073
        %v1075 = vsel %vm1071, %v1026, 0.0
        %1076 = vadd.xlane.f32.xlu0 %v1075
        %v1077 = vpop.xlane.xlu0 %1076
        %v1078 = vsel %vm1071, %v1028, 0.0
        %1079 = vadd.xlane.f32.xlu0 %v1078
        %v1080 = vpop.xlane.xlu0 %1079
        %v1081 = vsel %vm1071, %v1030, 0.0
        %1082 = vadd.xlane.f32.xlu0 %v1081
        %v1083 = vpop.xlane.xlu0 %1082
        %v1084 = vsel %vm1071, %v1032, 0.0
        %1085 = vadd.xlane.f32.xlu0 %v1084
        %v1086 = vpop.xlane.xlu0 %1085
        %v1087 = vsel %vm1071, %v1034, 0.0
        %1088 = vadd.xlane.f32.xlu0 %v1087
        %v1089 = vpop.xlane.xlu0 %1088
        %v1090 = vsel %vm1071, %v1036, 0.0
        %1091 = vadd.xlane.f32.xlu0 %v1090
        %v1092 = vpop.xlane.xlu0 %1091
        %v1093 = vsel %vm1071, %v1038, 0.0
        %1094 = vadd.xlane.f32.xlu0 %v1093
        %v1095 = vpop.xlane.xlu0 %1094
        %v1096 = vsel %vm1071, %v1040, 0.0
        %1097 = vadd.xlane.f32.xlu0 %v1096
        %v1098 = vpop.xlane.xlu0 %1097
        %v1099 = vsel %vm1071, %v1042, 0.0
        %1100 = vadd.xlane.f32.xlu0 %v1099
        %v1101 = vpop.xlane.xlu0 %1100
        %v1102 = vsel %vm1071, %v1044, 0.0
        %1103 = vadd.xlane.f32.xlu0 %v1102
        %v1104 = vpop.xlane.xlu0 %1103
        %v1105 = vsel %vm1071, %v1046, 0.0
        %1106 = vadd.xlane.f32.xlu0 %v1105
        %v1107 = vpop.xlane.xlu0 %1106
        %v1108 = vsel %vm1071, %v1048, 0.0
        %1109 = vadd.xlane.f32.xlu0 %v1108
        %v1110 = vpop.xlane.xlu0 %1109
        %v1111 = vsel %vm1071, %v1050, 0.0
        %1112 = vadd.xlane.f32.xlu0 %v1111
        %v1113 = vpop.xlane.xlu0 %1112
        %v1114 = vsel %vm1071, %v1052, 0.0
        %1115 = vadd.xlane.f32.xlu0 %v1114
        %v1116 = vpop.xlane.xlu0 %1115
        %v1117 = vsel %vm1071, %v1054, 0.0
        %1118 = vadd.xlane.f32.xlu0 %v1117
        %v1119 = vpop.xlane.xlu0 %1118
        %v1120 = vadd.f32 %v1074, %v1077
        %v1121 = vadd.f32 %v1120, %v1080
        %v1122 = vadd.f32 %v1121, %v1083
        %v1123 = vadd.f32 %v1122, %v1086
        %v1124 = vadd.f32 %v1123, %v1089
        %v1125 = vadd.f32 %v1124, %v1092
        %v1126 = vadd.f32 %v1125, %v1095
        %v1127 = vadd.f32 %v1126, %v1098
        %v1128 = vadd.f32 %v1127, %v1101
        %v1129 = vadd.f32 %v1128, %v1104
        %v1130 = vadd.f32 %v1129, %v1107
        %v1131 = vadd.f32 %v1130, %v1110
        %v1132 = vadd.f32 %v1131, %v1113
        %v1133 = vadd.f32 %v1132, %v1116
        %v1134 = vadd.f32 %v1133, %v1119
        %v1135 = vrot.slane %v1134, 4
        %v1136 = vadd.f32 %v1134, %v1135
        %v1137 = vrot.slane %v1136, 2
        %v1138 = vadd.f32 %v1136, %v1137
        %v1139 = vrot.slane %v1138, 1
        %v1140 = vadd.f32 %v1138, %v1139
        %v1141 = vld [vmem:[#allocation2] sm:$0x1]
        %v1142 = vadd.f32 %v1141, %v1140
        %vm1143 = vcmask 0
        %1144 = vst.msk [vmem:[#allocation2] sm:$0x1] %vm1143, %v1142
        %p1145 = scmp.eq.s32.totalorder %s19, 1
        // Predicated region
        $region53: #{tpu_custom_call.1} parent=47 // pred_check
          %p1146 = pneg %p1145
        $region54: #{tpu_custom_call.1} parent=47 // pred_check_branch
          %1148 = sbr.rel (%p1146) target = $region56
        $region55: #{tpu_custom_call.1} parent=47 // pred_region
          %v1149 = vld [vmem:[#allocation2] sm:$0x1]
          %v1150 = vmul.f32 %v1149, 0.001953125
          %1151 = vst.msk [vmem:[#allocation2] sm:$0x1] %vm1143, %v1150
        $region56: #{tpu_custom_call.1} parent=47 // pred_fallthru
          _
        // Predicated region
        $region57: #{tpu_custom_call.1} parent=47 // pred_check
          %p1152 = pneg %p194
        $region58: #{tpu_custom_call.1} parent=47 // pred_check_branch
          %1154 = sbr.rel (%p1152) target = $region60
        $region59: #{tpu_custom_call.1} parent=47 // pred_region
          %s1156 = ssub.s32 16, 16
          %1157 = vsyncadd [#allocation3], %s1156
          %s1159 = sshll.u32 [#allocation2], 4
          %s1160 = int_to_ptr.vmem [resolvable:$true] %s1159
          %1162 = dma.vmem_to_hbm [thread:$0]  %s1160, 16, %s7, [#allocation3]
        $region60: #{tpu_custom_call.1} parent=47 // pred_fallthru
          _
        // Predicated region
        $region61: #{tpu_custom_call.1} parent=47 // pred_check
          %p1163 = pneg %p194
        $region62: #{tpu_custom_call.1} parent=47 // pred_check_branch
          %1165 = sbr.rel (%p1163) target = $region64
        $region63: #{tpu_custom_call.1} parent=47 // pred_region
          %1166 = dma.done [#allocation3], 16
        $region64: #{tpu_custom_call.1} parent=47 // pred_fallthru
          _
      $region48: #{tpu_custom_call.1} parent=5 // pred_fallthru
        _
      %p1167 = scmp.le.s32.totalorder 2, %s14
      // Predicated region
      $region65: #{tpu_custom_call.1} parent=5 // pred_check
        %p1168 = pneg %p1167
      $region66: #{tpu_custom_call.1} parent=5 // pred_check_branch
        %1170 = sbr.rel (%p1168) target = $region68
      $region67: #{tpu_custom_call.1} parent=5 // pred_region
        %s1171 = ssub.s32 %s14, 2
      $region68: #{tpu_custom_call.1} parent=5 // pred_fallthru
        _
    $region6: #{tpu_custom_call.1} parent=1 // loop_footer
      %s18 = sadd.s32 1, %s14
    $region7: #{tpu_custom_call.1} parent=1 // loop_footer_branch
      %13 = sbr.rel target = $region3
    $region8: #{tpu_custom_call.1} parent=1 // loop_exit
      _
    %1172 = vsyncpa [#allocation3], 1
    %s1173 = scalar_lea.sflag [#allocation3], 1
    %1174 = vsyncpa %s1173, 1

</llo_original>
